<compile_context>
chip_gen: v7x
topology: tpu7x:2x2x1
jax: 0.10.0
libtpu: 0.0.40
codegen_flags: <defaults>
</compile_context>

<pallas_src>
import math
from functools import partial

import jax
import jax.numpy as jnp
from jax.experimental import pallas as pl
from jax.experimental.pallas import tpu as pltpu


_GATHER_MAX_ROWS_PER_STEP = 32   # row DMAs per grid step (amortizes ~0.35us/step overhead)
_MATMUL_MAX_ROWS_PER_STEP = 256  # fills the 256-row MXU M dimension on v6e/v7x


def _round_up(x: int, m: int) -> int:
    return ((x + m - 1) // m) * m


def _vmem_capacity_bytes() -> int:
    try:
        return int(pltpu.get_tpu_info().vmem_capacity_bytes)
    except Exception:  # pragma: no cover - defensive fallback
        return 64 * 1024 * 1024  # v7x physical VMEM; conservative for v5e/v6e (128 MiB)


# ---------------------------------------------------------------------------
# Path 1: DMA row gather (B < vocab).  Table never leaves HBM.
# ---------------------------------------------------------------------------
def _gather_rows_kernel(idx_ref, table_ref, out_ref, row_buf, copy_sems):
    # idx_ref  : (B_pad,) int32 in SMEM (scalar prefetch)
    # table_ref: (Vp, Dp) in HBM (memory_space=pl.ANY)
    # out_ref  : (TB, Dp) VMEM output block for this grid step
    # row_buf  : (TB, Dp) VMEM scratch the row DMAs land in
    # copy_sems: (TB,) DMA semaphores
    i = pl.program_id(0)
    tb = out_ref.shape[0]
    copies = []
    for j in range(tb):                       # static unroll (tb <= 32)
        row = idx_ref[i * tb + j]
        cp = pltpu.make_async_copy(
            table_ref.at[pl.ds(row, 1), :],
            row_buf.at[pl.ds(j, 1), :],
            copy_sems.at[j],
        )
        cp.start()
        copies.append(cp)
    for cp in copies:                         # all TB row fetches in flight, then wait
        cp.wait()
    out_ref[...] = row_buf[...]               # one lane-dense (TB, Dp) store


def _lookup_dma_gather(table, idx):
    Vp, Dp = table.shape
    B = idx.shape[0]
    tb = min(_GATHER_MAX_ROWS_PER_STEP, _round_up(B, 8))
    n_blocks = pl.cdiv(B, tb)
    B_pad = n_blocks * tb
    if B_pad != B:
        idx = jnp.pad(idx, (0, B_pad - B))    # padded ids gather row 0; sliced away by caller

    grid_spec = pltpu.PrefetchScalarGridSpec(
        num_scalar_prefetch=1,                # ids land in SMEM before the grid runs
        grid=(n_blocks,),
        in_specs=[pl.BlockSpec(memory_space=pl.ANY)],   # table stays in HBM
        out_specs=pl.BlockSpec((tb, Dp), lambda i, idx_ref: (i, 0)),
        scratch_shapes=[
            pltpu.VMEM((tb, Dp), table.dtype),
            pltpu.SemaphoreType.DMA((tb,)),
        ],
    )
    return pl.pallas_call(
        _gather_rows_kernel,
        grid_spec=grid_spec,
        out_shape=jax.ShapeDtypeStruct((B_pad, Dp), table.dtype),
        compiler_params=pltpu.CompilerParams(
            # Batch tiles are independent and nothing is VMEM-resident across the
            # grid, so megacore sharding on v7x is free.
            dimension_semantics=("parallel",),
        ),
    )(idx, table)


# ---------------------------------------------------------------------------
# Path 2: one-hot MXU matmul against a VMEM-resident table (B >= vocab).
# ---------------------------------------------------------------------------
def _onehot_matmul_kernel(idx_ref, table_hbm, out_ref, table_vmem, load_sem):
    # idx_ref   : (TB, 1) int32 class ids for this batch tile
    # table_hbm : (Vp, Dp) table in HBM
    # out_ref   : (TB, Dp) output tile
    # table_vmem: (Vp, Dp) VMEM scratch — single-buffered residency, loaded once
    @pl.when(pl.program_id(0) == 0)
    def _():
        cp = pltpu.make_async_copy(table_hbm, table_vmem, load_sem.at[0])
        cp.start()
        cp.wait()

    tb = out_ref.shape[0]
    vp = table_vmem.shape[0]
    ids = idx_ref[...]                                                  # (TB, 1)
    onehot = (
        jax.lax.broadcasted_iota(jnp.int32, (tb, vp), 1) == ids
    ).astype(table_vmem.dtype)                                          # (TB, Vp)
    out_ref[...] = jnp.dot(
        onehot,
        table_vmem[...],
        preferred_element_type=jnp.float32,
        precision=jax.lax.Precision.HIGHEST,   # exact f32 row reproduction (no bf16 1-pass)
    ).astype(out_ref.dtype)


def _lookup_onehot_matmul(table, idx, *, vmem_limit_bytes):
    Vp, Dp = table.shape
    B = idx.shape[0]
    tb = min(_MATMUL_MAX_ROWS_PER_STEP, _round_up(B, 8))
    n_blocks = pl.cdiv(B, tb)
    B_pad = n_blocks * tb
    if B_pad != B:
        idx = jnp.pad(idx, (0, B_pad - B))
    idx2d = idx.reshape(B_pad, 1)

    grid_spec = pltpu.PrefetchScalarGridSpec(
        num_scalar_prefetch=0,
        grid=(n_blocks,),
        in_specs=[
            pl.BlockSpec((tb, 1), lambda i: (i, 0)),   # class ids for this tile
            pl.BlockSpec(memory_space=pl.ANY),         # table: loaded once in-kernel
        ],
        out_specs=pl.BlockSpec((tb, Dp), lambda i: (i, 0)),
        scratch_shapes=[
            pltpu.VMEM((Vp, Dp), table.dtype),         # single-buffered resident table
            pltpu.SemaphoreType.DMA((1,)),
        ],
    )
    return pl.pallas_call(
        _onehot_matmul_kernel,
        grid_spec=grid_spec,
        out_shape=jax.ShapeDtypeStruct((B_pad, Dp), table.dtype),
        compiler_params=pltpu.CompilerParams(
            # "arbitrary": the step-0 table load must execute on the core that runs
            # the whole grid; also avoids streaming a duplicate resident table per
            # TensorCore on v7x megacore.
            dimension_semantics=("arbitrary",),
            vmem_limit_bytes=vmem_limit_bytes,
        ),
    )(idx2d, table)


# ---------------------------------------------------------------------------
# Dispatcher.
# ---------------------------------------------------------------------------
@partial(jax.jit, static_argnames=("num_valid_rows", "d_out"))
def embedding_lookup(table, indices, *, num_valid_rows, d_out):
    """Gather rows of the (pre-padded) embedding table at `indices`.

    table:   (Vp, Dp) float32, rows/cols already padded to multiples of 128 at init.
    indices: (B,) integer class ids in [0, num_valid_rows).
    returns: (B, d_out) float32
    """
    Vp, Dp = table.shape
    B = indices.shape[0]
    itemsize = table.dtype.itemsize

    # Clamp: OOB ids are not runtime-checked on TPU (PyTorch nn.Embedding raises).
    idx = jnp.clip(indices.astype(jnp.int32), 0, num_valid_rows - 1)

    cap = _vmem_capacity_bytes()
    table_bytes = Vp * Dp * itemsize
    resident_need = (
        table_bytes
        + 2 * _MATMUL_MAX_ROWS_PER_STEP * Dp * itemsize   # double-buffered out tiles
        + (8 << 20)                                       # compiler / I-O headroom
    )

    if B >= num_valid_rows and resident_need <= int(0.85 * cap):
        # Batch at least vocab-sized: stream the table HBM->VMEM once and gather
        # with a one-hot MXU matmul over large batch tiles.
        out = _lookup_onehot_matmul(table, idx, vmem_limit_bytes=resident_need)
    else:
        # Common ClassEmbedder case (B << vocab): DMA-gather exactly the requested
        # rows; only B*D bytes leave HBM and the table never has to fit in VMEM.
        out = _lookup_dma_gather(table, idx)
    return out[:B, :d_out]


class ClassEmbedder:
    """JAX/Pallas port of the PyTorch ClassEmbedder module."""

    def __init__(self, embed_dim=512, num_classes=1000, cond_drop_rate=0.0, *, key=None):
        if key is None:
            key = jax.random.PRNGKey(0)
        self.num_classes = num_classes
        self.embed_dim = embed_dim
        self.cond_drop_rate = cond_drop_rate
        num_rows = num_classes + 1            # last row = null (unconditional) class
        self._num_rows = num_rows

        init_std = math.sqrt(1.0 / embed_dim / 3.0)
        # PyTorch trunc_normal_(mean=0, std=s) truncates at +/-2 in VALUE space,
        # i.e. +/-(2/s) sigmas of the scaled distribution.
        lim = 2.0 / init_std
        self.embedding_weight = (
            jax.random.truncated_normal(key, -lim, lim, (num_rows, embed_dim), jnp.float32)
            * init_std
        )

        # Pad ONCE at init (not in the jitted hot path): rows to a multiple of 128
        # (aligned MXU contraction dim for the one-hot path) and embed_dim to a
        # multiple of 128 (lane-dense VMEM tiles / output slabs).  Padded rows are
        # zero and never addressed because ids are clamped to num_rows - 1.
        v_pad = _round_up(num_rows, 128)
        d_pad = _round_up(embed_dim, 128)
        self._table = jnp.pad(
            self.embedding_weight, ((0, v_pad - num_rows), (0, d_pad - embed_dim))
        )
        # TODO(synk): optionally store/stream the table in bf16 (halves HBM bytes and
        #             VMEM residency) when downstream consumers tolerate bf16 embeddings.

    def __call__(self, x: jax.Array, *, drop_key=None) -> jax.Array:
        if self.cond_drop_rate > 0:
            if drop_key is None:
                raise ValueError(
                    "cond_drop_rate > 0 requires an explicit drop_key "
                    "(avoids silently deterministic classifier-free-guidance drops)."
                )
            b = x.shape[0]
            drop = jax.random.uniform(drop_key, (b,)) < self.cond_drop_rate
            x = jnp.where(drop, jnp.int32(self.num_classes), x)
        return embedding_lookup(
            self._table, x, num_valid_rows=self._num_rows, d_out=self.embed_dim
        )


if __name__ == "__main__":
    key = jax.random.PRNGKey(0)
    k_init, k_idx, k_drop = jax.random.split(key, 3)

    # Small shapes consistent with the module: batch=8, embed_dim=128, 100 classes.
    embed_dim, num_classes, batch = 128, 100, 8
    embedder = ClassEmbedder(
        embed_dim=embed_dim, num_classes=num_classes, cond_drop_rate=0.0, key=k_init
    )
    x = jax.random.randint(k_idx, (batch,), 0, num_classes, dtype=jnp.int32)

    c = jax.block_until_ready(embedder(x))
    assert c.shape == (batch, embed_dim)
    assert jnp.allclose(c, embedder.embedding_weight[x]), "gather-path mismatch"

    # Ragged batch (exercises batch padding inside the gather path).
    x5 = x[:5]
    c5 = jax.block_until_ready(embedder(x5))
    assert c5.shape == (5, embed_dim)
    assert jnp.allclose(c5, embedder.embedding_weight[x5]), "ragged-batch mismatch"

    # Non-multiple-of-128 embed_dim (exercises init-time D padding + output slice).
    emb64 = ClassEmbedder(embed_dim=64, num_classes=10, cond_drop_rate=0.0, key=k_init)
    x64 = jax.random.randint(k_idx, (batch,), 0, 10, dtype=jnp.int32)
    c64 = jax.block_until_ready(emb64(x64))
    assert c64.shape == (batch, 64)
    assert jnp.allclose(c64, emb64.embedding_weight[x64]), "D-pad mismatch"

    # Batch >= vocab: exercises the resident-table one-hot MXU path.
    emb_mm = ClassEmbedder(embed_dim=128, num_classes=6, cond_drop_rate=0.0, key=k_init)
    x_mm = jax.random.randint(k_idx, (16,), 0, 7, dtype=jnp.int32)
    c_mm = jax.block_until_ready(emb_mm(x_mm))
    assert c_mm.shape == (16, 128)
    assert jnp.allclose(c_mm, emb_mm.embedding_weight[x_mm]), "one-hot matmul path mismatch"

    # Classifier-free-guidance drop (rate=1.0 -> every row is the null class).
    emb_drop = ClassEmbedder(
        embed_dim=embed_dim, num_classes=num_classes, cond_drop_rate=1.0, key=k_init
    )
    c_drop = jax.block_until_ready(emb_drop(x, drop_key=k_drop))
    null_row = emb_drop.embedding_weight[num_classes]
    assert jnp.allclose(c_drop, jnp.broadcast_to(null_row, (batch, embed_dim))), "drop mismatch"

    print("KERNEL_OK")
</pallas_src>

<mosaic_0001>
module attributes {stable_mosaic.version = 11 : i64} {
  func.func @_gather_rows_kernel(%arg0: i32, %arg1: memref<8xi32, #tpu.memory_space<smem>>, %arg2: memref<128x128xf32, #tpu.memory_space<any>>, %arg3: memref<8x128xf32, #tpu.memory_space<vmem>>, %arg4: memref<8x128xf32, #tpu.memory_space<vmem>>, %arg5: memref<8x!tpu.dma_semaphore, #tpu.memory_space<semaphore_mem>>) attributes {dimension_semantics = [#tpu.dimension_semantics<parallel>], iteration_bounds = array<i64: 1>, scalar_prefetch = 1 : i64, scratch_operands = 2 : i64, tpu.core_type = #tpu.core_type<tc>, window_params = [{}, {transform_indices = @transform_1, window_bounds = array<i64: 8, 128>}]} {
    %c8_i32 = arith.constant 8 : i32
    %0 = arith.muli %arg0, %c8_i32 : i32
    %c0_i32 = arith.constant 0 : i32
    %1 = arith.addi %0, %c0_i32 : i32
    %2 = arith.index_cast %1 : i32 to index
    %3 = memref.load %arg1[%2] : memref<8xi32, #tpu.memory_space<smem>>
    %c0_i32_0 = arith.constant 0 : i32
    %c0_i32_1 = arith.constant 0 : i32
    %4 = tpu.memref_slice %arg2[%3, %c0_i32_1] : memref<128x128xf32, #tpu.memory_space<any>> -> memref<1x128xf32, #tpu.memory_space<any>>
    %c0_i32_2 = arith.constant 0 : i32
    %c0_i32_3 = arith.constant 0 : i32
    %5 = tpu.memref_slice %arg4[%c0_i32_2, %c0_i32_3] : memref<8x128xf32, #tpu.memory_space<vmem>> -> memref<1x128xf32, #tpu.memory_space<vmem>>
    %6 = tpu.memref_slice %arg5[%c0_i32_0] : memref<8x!tpu.dma_semaphore, #tpu.memory_space<semaphore_mem>> -> memref<1x!tpu.dma_semaphore, #tpu.memory_space<semaphore_mem>>
    %7 = tpu.memref_squeeze %6 : memref<1x!tpu.dma_semaphore, #tpu.memory_space<semaphore_mem>> -> memref<!tpu.dma_semaphore, #tpu.memory_space<semaphore_mem>>
    tpu.enqueue_dma source(%4 : memref<1x128xf32, #tpu.memory_space<any>>) target(%5 : memref<1x128xf32, #tpu.memory_space<vmem>>) target_semaphore(%7 : memref<!tpu.dma_semaphore, #tpu.memory_space<semaphore_mem>>)
    %c8_i32_4 = arith.constant 8 : i32
    %8 = arith.muli %arg0, %c8_i32_4 : i32
    %c1_i32 = arith.constant 1 : i32
    %9 = arith.addi %8, %c1_i32 : i32
    %10 = arith.index_cast %9 : i32 to index
    %11 = memref.load %arg1[%10] : memref<8xi32, #tpu.memory_space<smem>>
    %c1_i32_5 = arith.constant 1 : i32
    %c0_i32_6 = arith.constant 0 : i32
    %12 = tpu.memref_slice %arg2[%11, %c0_i32_6] : memref<128x128xf32, #tpu.memory_space<any>> -> memref<1x128xf32, #tpu.memory_space<any>>
    %c1_i32_7 = arith.constant 1 : i32
    %c0_i32_8 = arith.constant 0 : i32
    %13 = tpu.memref_slice %arg4[%c1_i32_7, %c0_i32_8] : memref<8x128xf32, #tpu.memory_space<vmem>> -> memref<1x128xf32, #tpu.memory_space<vmem>>
    %14 = tpu.memref_slice %arg5[%c1_i32_5] : memref<8x!tpu.dma_semaphore, #tpu.memory_space<semaphore_mem>> -> memref<1x!tpu.dma_semaphore, #tpu.memory_space<semaphore_mem>>
    %15 = tpu.memref_squeeze %14 : memref<1x!tpu.dma_semaphore, #tpu.memory_space<semaphore_mem>> -> memref<!tpu.dma_semaphore, #tpu.memory_space<semaphore_mem>>
    tpu.enqueue_dma source(%12 : memref<1x128xf32, #tpu.memory_space<any>>) target(%13 : memref<1x128xf32, #tpu.memory_space<vmem>>) target_semaphore(%15 : memref<!tpu.dma_semaphore, #tpu.memory_space<semaphore_mem>>)
    %c8_i32_9 = arith.constant 8 : i32
    %16 = arith.muli %arg0, %c8_i32_9 : i32
    %c2_i32 = arith.constant 2 : i32
    %17 = arith.addi %16, %c2_i32 : i32
    %18 = arith.index_cast %17 : i32 to index
    %19 = memref.load %arg1[%18] : memref<8xi32, #tpu.memory_space<smem>>
    %c2_i32_10 = arith.constant 2 : i32
    %c0_i32_11 = arith.constant 0 : i32
    %20 = tpu.memref_slice %arg2[%19, %c0_i32_11] : memref<128x128xf32, #tpu.memory_space<any>> -> memref<1x128xf32, #tpu.memory_space<any>>
    %c2_i32_12 = arith.constant 2 : i32
    %c0_i32_13 = arith.constant 0 : i32
    %21 = tpu.memref_slice %arg4[%c2_i32_12, %c0_i32_13] : memref<8x128xf32, #tpu.memory_space<vmem>> -> memref<1x128xf32, #tpu.memory_space<vmem>>
    %22 = tpu.memref_slice %arg5[%c2_i32_10] : memref<8x!tpu.dma_semaphore, #tpu.memory_space<semaphore_mem>> -> memref<1x!tpu.dma_semaphore, #tpu.memory_space<semaphore_mem>>
    %23 = tpu.memref_squeeze %22 : memref<1x!tpu.dma_semaphore, #tpu.memory_space<semaphore_mem>> -> memref<!tpu.dma_semaphore, #tpu.memory_space<semaphore_mem>>
    tpu.enqueue_dma source(%20 : memref<1x128xf32, #tpu.memory_space<any>>) target(%21 : memref<1x128xf32, #tpu.memory_space<vmem>>) target_semaphore(%23 : memref<!tpu.dma_semaphore, #tpu.memory_space<semaphore_mem>>)
    %c8_i32_14 = arith.constant 8 : i32
    %24 = arith.muli %arg0, %c8_i32_14 : i32
    %c3_i32 = arith.constant 3 : i32
    %25 = arith.addi %24, %c3_i32 : i32
    %26 = arith.index_cast %25 : i32 to index
    %27 = memref.load %arg1[%26] : memref<8xi32, #tpu.memory_space<smem>>
    %c3_i32_15 = arith.constant 3 : i32
    %c0_i32_16 = arith.constant 0 : i32
    %28 = tpu.memref_slice %arg2[%27, %c0_i32_16] : memref<128x128xf32, #tpu.memory_space<any>> -> memref<1x128xf32, #tpu.memory_space<any>>
    %c3_i32_17 = arith.constant 3 : i32
    %c0_i32_18 = arith.constant 0 : i32
    %29 = tpu.memref_slice %arg4[%c3_i32_17, %c0_i32_18] : memref<8x128xf32, #tpu.memory_space<vmem>> -> memref<1x128xf32, #tpu.memory_space<vmem>>
    %30 = tpu.memref_slice %arg5[%c3_i32_15] : memref<8x!tpu.dma_semaphore, #tpu.memory_space<semaphore_mem>> -> memref<1x!tpu.dma_semaphore, #tpu.memory_space<semaphore_mem>>
    %31 = tpu.memref_squeeze %30 : memref<1x!tpu.dma_semaphore, #tpu.memory_space<semaphore_mem>> -> memref<!tpu.dma_semaphore, #tpu.memory_space<semaphore_mem>>
    tpu.enqueue_dma source(%28 : memref<1x128xf32, #tpu.memory_space<any>>) target(%29 : memref<1x128xf32, #tpu.memory_space<vmem>>) target_semaphore(%31 : memref<!tpu.dma_semaphore, #tpu.memory_space<semaphore_mem>>)
    %c8_i32_19 = arith.constant 8 : i32
    %32 = arith.muli %arg0, %c8_i32_19 : i32
    %c4_i32 = arith.constant 4 : i32
    %33 = arith.addi %32, %c4_i32 : i32
    %34 = arith.index_cast %33 : i32 to index
    %35 = memref.load %arg1[%34] : memref<8xi32, #tpu.memory_space<smem>>
    %c4_i32_20 = arith.constant 4 : i32
    %c0_i32_21 = arith.constant 0 : i32
    %36 = tpu.memref_slice %arg2[%35, %c0_i32_21] : memref<128x128xf32, #tpu.memory_space<any>> -> memref<1x128xf32, #tpu.memory_space<any>>
    %c4_i32_22 = arith.constant 4 : i32
    %c0_i32_23 = arith.constant 0 : i32
    %37 = tpu.memref_slice %arg4[%c4_i32_22, %c0_i32_23] : memref<8x128xf32, #tpu.memory_space<vmem>> -> memref<1x128xf32, #tpu.memory_space<vmem>>
    %38 = tpu.memref_slice %arg5[%c4_i32_20] : memref<8x!tpu.dma_semaphore, #tpu.memory_space<semaphore_mem>> -> memref<1x!tpu.dma_semaphore, #tpu.memory_space<semaphore_mem>>
    %39 = tpu.memref_squeeze %38 : memref<1x!tpu.dma_semaphore, #tpu.memory_space<semaphore_mem>> -> memref<!tpu.dma_semaphore, #tpu.memory_space<semaphore_mem>>
    tpu.enqueue_dma source(%36 : memref<1x128xf32, #tpu.memory_space<any>>) target(%37 : memref<1x128xf32, #tpu.memory_space<vmem>>) target_semaphore(%39 : memref<!tpu.dma_semaphore, #tpu.memory_space<semaphore_mem>>)
    %c8_i32_24 = arith.constant 8 : i32
    %40 = arith.muli %arg0, %c8_i32_24 : i32
    %c5_i32 = arith.constant 5 : i32
    %41 = arith.addi %40, %c5_i32 : i32
    %42 = arith.index_cast %41 : i32 to index
    %43 = memref.load %arg1[%42] : memref<8xi32, #tpu.memory_space<smem>>
    %c5_i32_25 = arith.constant 5 : i32
    %c0_i32_26 = arith.constant 0 : i32
    %44 = tpu.memref_slice %arg2[%43, %c0_i32_26] : memref<128x128xf32, #tpu.memory_space<any>> -> memref<1x128xf32, #tpu.memory_space<any>>
    %c5_i32_27 = arith.constant 5 : i32
    %c0_i32_28 = arith.constant 0 : i32
    %45 = tpu.memref_slice %arg4[%c5_i32_27, %c0_i32_28] : memref<8x128xf32, #tpu.memory_space<vmem>> -> memref<1x128xf32, #tpu.memory_space<vmem>>
    %46 = tpu.memref_slice %arg5[%c5_i32_25] : memref<8x!tpu.dma_semaphore, #tpu.memory_space<semaphore_mem>> -> memref<1x!tpu.dma_semaphore, #tpu.memory_space<semaphore_mem>>
    %47 = tpu.memref_squeeze %46 : memref<1x!tpu.dma_semaphore, #tpu.memory_space<semaphore_mem>> -> memref<!tpu.dma_semaphore, #tpu.memory_space<semaphore_mem>>
    tpu.enqueue_dma source(%44 : memref<1x128xf32, #tpu.memory_space<any>>) target(%45 : memref<1x128xf32, #tpu.memory_space<vmem>>) target_semaphore(%47 : memref<!tpu.dma_semaphore, #tpu.memory_space<semaphore_mem>>)
    %c8_i32_29 = arith.constant 8 : i32
    %48 = arith.muli %arg0, %c8_i32_29 : i32
    %c6_i32 = arith.constant 6 : i32
    %49 = arith.addi %48, %c6_i32 : i32
    %50 = arith.index_cast %49 : i32 to index
    %51 = memref.load %arg1[%50] : memref<8xi32, #tpu.memory_space<smem>>
    %c6_i32_30 = arith.constant 6 : i32
    %c0_i32_31 = arith.constant 0 : i32
    %52 = tpu.memref_slice %arg2[%51, %c0_i32_31] : memref<128x128xf32, #tpu.memory_space<any>> -> memref<1x128xf32, #tpu.memory_space<any>>
    %c6_i32_32 = arith.constant 6 : i32
    %c0_i32_33 = arith.constant 0 : i32
    %53 = tpu.memref_slice %arg4[%c6_i32_32, %c0_i32_33] : memref<8x128xf32, #tpu.memory_space<vmem>> -> memref<1x128xf32, #tpu.memory_space<vmem>>
    %54 = tpu.memref_slice %arg5[%c6_i32_30] : memref<8x!tpu.dma_semaphore, #tpu.memory_space<semaphore_mem>> -> memref<1x!tpu.dma_semaphore, #tpu.memory_space<semaphore_mem>>
    %55 = tpu.memref_squeeze %54 : memref<1x!tpu.dma_semaphore, #tpu.memory_space<semaphore_mem>> -> memref<!tpu.dma_semaphore, #tpu.memory_space<semaphore_mem>>
    tpu.enqueue_dma source(%52 : memref<1x128xf32, #tpu.memory_space<any>>) target(%53 : memref<1x128xf32, #tpu.memory_space<vmem>>) target_semaphore(%55 : memref<!tpu.dma_semaphore, #tpu.memory_space<semaphore_mem>>)
    %c8_i32_34 = arith.constant 8 : i32
    %56 = arith.muli %arg0, %c8_i32_34 : i32
    %c7_i32 = arith.constant 7 : i32
    %57 = arith.addi %56, %c7_i32 : i32
    %58 = arith.index_cast %57 : i32 to index
    %59 = memref.load %arg1[%58] : memref<8xi32, #tpu.memory_space<smem>>
    %c7_i32_35 = arith.constant 7 : i32
    %c0_i32_36 = arith.constant 0 : i32
    %60 = tpu.memref_slice %arg2[%59, %c0_i32_36] : memref<128x128xf32, #tpu.memory_space<any>> -> memref<1x128xf32, #tpu.memory_space<any>>
    %c7_i32_37 = arith.constant 7 : i32
    %c0_i32_38 = arith.constant 0 : i32
    %61 = tpu.memref_slice %arg4[%c7_i32_37, %c0_i32_38] : memref<8x128xf32, #tpu.memory_space<vmem>> -> memref<1x128xf32, #tpu.memory_space<vmem>>
    %62 = tpu.memref_slice %arg5[%c7_i32_35] : memref<8x!tpu.dma_semaphore, #tpu.memory_space<semaphore_mem>> -> memref<1x!tpu.dma_semaphore, #tpu.memory_space<semaphore_mem>>
    %63 = tpu.memref_squeeze %62 : memref<1x!tpu.dma_semaphore, #tpu.memory_space<semaphore_mem>> -> memref<!tpu.dma_semaphore, #tpu.memory_space<semaphore_mem>>
    tpu.enqueue_dma source(%60 : memref<1x128xf32, #tpu.memory_space<any>>) target(%61 : memref<1x128xf32, #tpu.memory_space<vmem>>) target_semaphore(%63 : memref<!tpu.dma_semaphore, #tpu.memory_space<semaphore_mem>>)
    %c0_i32_39 = arith.constant 0 : i32
    %c0_i32_40 = arith.constant 0 : i32
    %64 = tpu.memref_slice %arg2[%3, %c0_i32_40] : memref<128x128xf32, #tpu.memory_space<any>> -> memref<1x128xf32, #tpu.memory_space<any>>
    %c0_i32_41 = arith.constant 0 : i32
    %c0_i32_42 = arith.constant 0 : i32
    %65 = tpu.memref_slice %arg4[%c0_i32_41, %c0_i32_42] : memref<8x128xf32, #tpu.memory_space<vmem>> -> memref<1x128xf32, #tpu.memory_space<vmem>>
    %66 = tpu.memref_slice %arg5[%c0_i32_39] : memref<8x!tpu.dma_semaphore, #tpu.memory_space<semaphore_mem>> -> memref<1x!tpu.dma_semaphore, #tpu.memory_space<semaphore_mem>>
    %67 = tpu.memref_squeeze %66 : memref<1x!tpu.dma_semaphore, #tpu.memory_space<semaphore_mem>> -> memref<!tpu.dma_semaphore, #tpu.memory_space<semaphore_mem>>
    tpu.wait_dma2 semaphore(%67 : memref<!tpu.dma_semaphore, #tpu.memory_space<semaphore_mem>>) src(%64 : memref<1x128xf32, #tpu.memory_space<any>>) dst(%65 : memref<1x128xf32, #tpu.memory_space<vmem>>)
    %c1_i32_43 = arith.constant 1 : i32
    %c0_i32_44 = arith.constant 0 : i32
    %68 = tpu.memref_slice %arg2[%11, %c0_i32_44] : memref<128x128xf32, #tpu.memory_space<any>> -> memref<1x128xf32, #tpu.memory_space<any>>
    %c1_i32_45 = arith.constant 1 : i32
    %c0_i32_46 = arith.constant 0 : i32
    %69 = tpu.memref_slice %arg4[%c1_i32_45, %c0_i32_46] : memref<8x128xf32, #tpu.memory_space<vmem>> -> memref<1x128xf32, #tpu.memory_space<vmem>>
    %70 = tpu.memref_slice %arg5[%c1_i32_43] : memref<8x!tpu.dma_semaphore, #tpu.memory_space<semaphore_mem>> -> memref<1x!tpu.dma_semaphore, #tpu.memory_space<semaphore_mem>>
    %71 = tpu.memref_squeeze %70 : memref<1x!tpu.dma_semaphore, #tpu.memory_space<semaphore_mem>> -> memref<!tpu.dma_semaphore, #tpu.memory_space<semaphore_mem>>
    tpu.wait_dma2 semaphore(%71 : memref<!tpu.dma_semaphore, #tpu.memory_space<semaphore_mem>>) src(%68 : memref<1x128xf32, #tpu.memory_space<any>>) dst(%69 : memref<1x128xf32, #tpu.memory_space<vmem>>)
    %c2_i32_47 = arith.constant 2 : i32
    %c0_i32_48 = arith.constant 0 : i32
    %72 = tpu.memref_slice %arg2[%19, %c0_i32_48] : memref<128x128xf32, #tpu.memory_space<any>> -> memref<1x128xf32, #tpu.memory_space<any>>
    %c2_i32_49 = arith.constant 2 : i32
    %c0_i32_50 = arith.constant 0 : i32
    %73 = tpu.memref_slice %arg4[%c2_i32_49, %c0_i32_50] : memref<8x128xf32, #tpu.memory_space<vmem>> -> memref<1x128xf32, #tpu.memory_space<vmem>>
    %74 = tpu.memref_slice %arg5[%c2_i32_47] : memref<8x!tpu.dma_semaphore, #tpu.memory_space<semaphore_mem>> -> memref<1x!tpu.dma_semaphore, #tpu.memory_space<semaphore_mem>>
    %75 = tpu.memref_squeeze %74 : memref<1x!tpu.dma_semaphore, #tpu.memory_space<semaphore_mem>> -> memref<!tpu.dma_semaphore, #tpu.memory_space<semaphore_mem>>
    tpu.wait_dma2 semaphore(%75 : memref<!tpu.dma_semaphore, #tpu.memory_space<semaphore_mem>>) src(%72 : memref<1x128xf32, #tpu.memory_space<any>>) dst(%73 : memref<1x128xf32, #tpu.memory_space<vmem>>)
    %c3_i32_51 = arith.constant 3 : i32
    %c0_i32_52 = arith.constant 0 : i32
    %76 = tpu.memref_slice %arg2[%27, %c0_i32_52] : memref<128x128xf32, #tpu.memory_space<any>> -> memref<1x128xf32, #tpu.memory_space<any>>
    %c3_i32_53 = arith.constant 3 : i32
    %c0_i32_54 = arith.constant 0 : i32
    %77 = tpu.memref_slice %arg4[%c3_i32_53, %c0_i32_54] : memref<8x128xf32, #tpu.memory_space<vmem>> -> memref<1x128xf32, #tpu.memory_space<vmem>>
    %78 = tpu.memref_slice %arg5[%c3_i32_51] : memref<8x!tpu.dma_semaphore, #tpu.memory_space<semaphore_mem>> -> memref<1x!tpu.dma_semaphore, #tpu.memory_space<semaphore_mem>>
    %79 = tpu.memref_squeeze %78 : memref<1x!tpu.dma_semaphore, #tpu.memory_space<semaphore_mem>> -> memref<!tpu.dma_semaphore, #tpu.memory_space<semaphore_mem>>
    tpu.wait_dma2 semaphore(%79 : memref<!tpu.dma_semaphore, #tpu.memory_space<semaphore_mem>>) src(%76 : memref<1x128xf32, #tpu.memory_space<any>>) dst(%77 : memref<1x128xf32, #tpu.memory_space<vmem>>)
    %c4_i32_55 = arith.constant 4 : i32
    %c0_i32_56 = arith.constant 0 : i32
    %80 = tpu.memref_slice %arg2[%35, %c0_i32_56] : memref<128x128xf32, #tpu.memory_space<any>> -> memref<1x128xf32, #tpu.memory_space<any>>
    %c4_i32_57 = arith.constant 4 : i32
    %c0_i32_58 = arith.constant 0 : i32
    %81 = tpu.memref_slice %arg4[%c4_i32_57, %c0_i32_58] : memref<8x128xf32, #tpu.memory_space<vmem>> -> memref<1x128xf32, #tpu.memory_space<vmem>>
    %82 = tpu.memref_slice %arg5[%c4_i32_55] : memref<8x!tpu.dma_semaphore, #tpu.memory_space<semaphore_mem>> -> memref<1x!tpu.dma_semaphore, #tpu.memory_space<semaphore_mem>>
    %83 = tpu.memref_squeeze %82 : memref<1x!tpu.dma_semaphore, #tpu.memory_space<semaphore_mem>> -> memref<!tpu.dma_semaphore, #tpu.memory_space<semaphore_mem>>
    tpu.wait_dma2 semaphore(%83 : memref<!tpu.dma_semaphore, #tpu.memory_space<semaphore_mem>>) src(%80 : memref<1x128xf32, #tpu.memory_space<any>>) dst(%81 : memref<1x128xf32, #tpu.memory_space<vmem>>)
    %c5_i32_59 = arith.constant 5 : i32
    %c0_i32_60 = arith.constant 0 : i32
    %84 = tpu.memref_slice %arg2[%43, %c0_i32_60] : memref<128x128xf32, #tpu.memory_space<any>> -> memref<1x128xf32, #tpu.memory_space<any>>
    %c5_i32_61 = arith.constant 5 : i32
    %c0_i32_62 = arith.constant 0 : i32
    %85 = tpu.memref_slice %arg4[%c5_i32_61, %c0_i32_62] : memref<8x128xf32, #tpu.memory_space<vmem>> -> memref<1x128xf32, #tpu.memory_space<vmem>>
    %86 = tpu.memref_slice %arg5[%c5_i32_59] : memref<8x!tpu.dma_semaphore, #tpu.memory_space<semaphore_mem>> -> memref<1x!tpu.dma_semaphore, #tpu.memory_space<semaphore_mem>>
    %87 = tpu.memref_squeeze %86 : memref<1x!tpu.dma_semaphore, #tpu.memory_space<semaphore_mem>> -> memref<!tpu.dma_semaphore, #tpu.memory_space<semaphore_mem>>
    tpu.wait_dma2 semaphore(%87 : memref<!tpu.dma_semaphore, #tpu.memory_space<semaphore_mem>>) src(%84 : memref<1x128xf32, #tpu.memory_space<any>>) dst(%85 : memref<1x128xf32, #tpu.memory_space<vmem>>)
    %c6_i32_63 = arith.constant 6 : i32
    %c0_i32_64 = arith.constant 0 : i32
    %88 = tpu.memref_slice %arg2[%51, %c0_i32_64] : memref<128x128xf32, #tpu.memory_space<any>> -> memref<1x128xf32, #tpu.memory_space<any>>
    %c6_i32_65 = arith.constant 6 : i32
    %c0_i32_66 = arith.constant 0 : i32
    %89 = tpu.memref_slice %arg4[%c6_i32_65, %c0_i32_66] : memref<8x128xf32, #tpu.memory_space<vmem>> -> memref<1x128xf32, #tpu.memory_space<vmem>>
    %90 = tpu.memref_slice %arg5[%c6_i32_63] : memref<8x!tpu.dma_semaphore, #tpu.memory_space<semaphore_mem>> -> memref<1x!tpu.dma_semaphore, #tpu.memory_space<semaphore_mem>>
    %91 = tpu.memref_squeeze %90 : memref<1x!tpu.dma_semaphore, #tpu.memory_space<semaphore_mem>> -> memref<!tpu.dma_semaphore, #tpu.memory_space<semaphore_mem>>
    tpu.wait_dma2 semaphore(%91 : memref<!tpu.dma_semaphore, #tpu.memory_space<semaphore_mem>>) src(%88 : memref<1x128xf32, #tpu.memory_space<any>>) dst(%89 : memref<1x128xf32, #tpu.memory_space<vmem>>)
    %c7_i32_67 = arith.constant 7 : i32
    %c0_i32_68 = arith.constant 0 : i32
    %92 = tpu.memref_slice %arg2[%59, %c0_i32_68] : memref<128x128xf32, #tpu.memory_space<any>> -> memref<1x128xf32, #tpu.memory_space<any>>
    %c7_i32_69 = arith.constant 7 : i32
    %c0_i32_70 = arith.constant 0 : i32
    %93 = tpu.memref_slice %arg4[%c7_i32_69, %c0_i32_70] : memref<8x128xf32, #tpu.memory_space<vmem>> -> memref<1x128xf32, #tpu.memory_space<vmem>>
    %94 = tpu.memref_slice %arg5[%c7_i32_67] : memref<8x!tpu.dma_semaphore, #tpu.memory_space<semaphore_mem>> -> memref<1x!tpu.dma_semaphore, #tpu.memory_space<semaphore_mem>>
    %95 = tpu.memref_squeeze %94 : memref<1x!tpu.dma_semaphore, #tpu.memory_space<semaphore_mem>> -> memref<!tpu.dma_semaphore, #tpu.memory_space<semaphore_mem>>
    tpu.wait_dma2 semaphore(%95 : memref<!tpu.dma_semaphore, #tpu.memory_space<semaphore_mem>>) src(%92 : memref<1x128xf32, #tpu.memory_space<any>>) dst(%93 : memref<1x128xf32, #tpu.memory_space<vmem>>)
    %c0 = arith.constant 0 : index
    %c0_71 = arith.constant 0 : index
    %96 = vector.load %arg4[%c0, %c0_71] : memref<8x128xf32, #tpu.memory_space<vmem>>, vector<8x128xf32>
    %c0_72 = arith.constant 0 : index
    %c0_73 = arith.constant 0 : index
    %97 = vector.load %arg3[%c0_72, %c0_73] : memref<8x128xf32, #tpu.memory_space<vmem>>, vector<8x128xf32>
    tpu.vector_store %arg3[%c0_72, %c0_73], %96 {strides = array<i32>} : memref<8x128xf32, #tpu.memory_space<vmem>>, vector<8x128xf32>,
    return
  }
  func.func @transform_1(%arg0: i32, %arg1: memref<8xi32, #tpu.memory_space<smem>>) -> (i32, i32) {
    %c0_i32 = arith.constant 0 : i32
    %c0_i32_0 = arith.constant 0 : i32
    return %arg0, %c0_i32 : i32, i32
  }
}

</mosaic_0001>

<llo_original>
// kernel: embedding_lookup.1
$region0: #{embedding_lookup.1}
  #allocation0 [shape = 'u32[]', space=smem, size = 0x4, offset = 0x4, fixed_abs, tag = 'smem constant byte address 0x4 - core index']
  #allocation1 [shape = 'u32[144,128]{1,0:T(1,128)}', space=vmem, size = 0x12000, scoped, tag = 'internal scratch']
  #allocation2 [shape = 'f32[8,128]{1,0:T(8,128)}', space=vmem, size = 0x1000, scoped, tag = 'scratch operand']
  #allocation3 [shape = 's32[8]{0}', space=sflag, size = 0x20, scoped, tag = 'scratch operand']
  #allocation4 [shape = 's32[1]{0}', space=sflag, size = 0x4, scoped, tag = 'scoped memory for embedding_lookup.1']
  #allocation5 [shape = 'u8[512]{0}', space=smem, size = 0x200, scoped, tag = 'prefetched SMEM operand 0']
  #allocation8 [shape = 's32[]', space=sflag, size = 0x4, offset = 0, fixed_abs, tag = 'sflag constant byte address 0x0 - dummy sync flag']
  #allocation9 [shape = 's32[]', space=sflag, size = 0x4, offset = 0, fixed_abs, tag = 'sflag constant byte address 0x0 - dummy sync flag']
  #allocation10 [shape = 'u32[]', space=smem, size = 0x4, offset = 0x44, fixed_abs, tag = 'smem constant byte address 0x44 - assertion arg 0']
  #allocation11 [shape = 'u32[]', space=smem, size = 0x4, offset = 0x48, fixed_abs, tag = 'smem constant byte address 0x48 - assertion arg 1']
  #allocation12 [shape = 's32[]', space=sflag, size = 0x4, offset = 0, fixed_abs, tag = 'sflag constant byte address 0x0 - dummy sync flag']
  #allocation13 [shape = 's32[]', space=sflag, size = 0x4, offset = 0, fixed_abs, tag = 'sflag constant byte address 0x0 - dummy sync flag']
  #allocation14 [shape = 's32[]', space=sflag, size = 0x4, offset = 0, fixed_abs, tag = 'sflag constant byte address 0x0 - dummy sync flag']
  #allocation15 [shape = 's32[]', space=sflag, size = 0x4, offset = 0, fixed_abs, tag = 'sflag constant byte address 0x0 - dummy sync flag']
  #allocation16 [shape = 's32[]', space=sflag, size = 0x4, offset = 0, fixed_abs, tag = 'sflag constant byte address 0x0 - dummy sync flag']
  #allocation17 [shape = 's32[]', space=sflag, size = 0x4, offset = 0, fixed_abs, tag = 'sflag constant byte address 0x0 - dummy sync flag']
  #allocation18 [shape = 's32[]', space=sflag, size = 0x4, offset = 0, fixed_abs, tag = 'sflag constant byte address 0x0 - dummy sync flag']
  #allocation19 [shape = 's32[]', space=sflag, size = 0x4, offset = 0, fixed_abs, tag = 'sflag constant byte address 0x0 - dummy sync flag']
  #allocation20 [shape = 's32[]', space=sflag, size = 0x4, offset = 0, fixed_abs, tag = 'sflag constant byte address 0x0 - dummy sync flag']
  #allocation21 [shape = 's32[]', space=sflag, size = 0x4, offset = 0, fixed_abs, tag = 'sflag constant byte address 0x0 - dummy sync flag']
  #allocation22 [shape = 's32[]', space=sflag, size = 0x4, offset = 0, fixed_abs, tag = 'sflag constant byte address 0x0 - dummy sync flag']
  #allocation23 [shape = 's32[]', space=sflag, size = 0x4, offset = 0, fixed_abs, tag = 'sflag constant byte address 0x0 - dummy sync flag']
  #allocation24 [shape = 's32[]', space=sflag, size = 0x4, offset = 0, fixed_abs, tag = 'sflag constant byte address 0x0 - dummy sync flag']
  #allocation25 [shape = 's32[]', space=sflag, size = 0x4, offset = 0, fixed_abs, tag = 'sflag constant byte address 0x0 - dummy sync flag']
  %s0 = inlined_call_operand.vmem [shape: s32[8], index: 0, kind: input, shape index: {}]
  %s1 = inlined_call_operand.hbm [shape: f32[128,128], index: 1, kind: input, shape index: {}]
  %s2 = inlined_call_operand.hbm [shape: f32[8,128], index: 2, kind: output, shape index: {}]
  %s3 = sld [smem:[#allocation0]]
  $region42: #{embedding_lookup.1} parent=0
    _
  %s5 = ssub.s32 1, %s3
  %s6 = scalar_select 0, %s5, %s3
  %s7 = sshll.u32 %s0, 4
  %s8 = int_to_ptr.vmem [resolvable:$true] %s7
  %10 = dma.vmem_to_smem %s8, 16, [#allocation5], [#allocation4]
  %11 = dma.done [#allocation4], 16
  %12 = sfence
  $region1: #{embedding_lookup.1} parent=0
    #allocation6 [shape = 'u8[4096]{0}', space=vmem, size = 0x1000, scoped, tag = 'output window, operand 0, single buffered']
    #allocation7 [shape = 's32[1]{0}', space=sflag, size = 0x4, scoped, tag = 'scoped memory for embedding_lookup.1']
    %13 = vsyncpa [#allocation7], 0
    %s14 = smul.u32 0, 8
    %s15 = sld [smem:[#allocation5 + %s14]]
    %s16 = smul.addr %s15, 16
    %s17 = scalar_lea.hbm %s1, %s16
    // Predicated region
    $region2: #{embedding_lookup.1} parent=1 // pred_check
      _
    $region3: #{embedding_lookup.1} parent=1 // pred_check_branch
      %19 = sbr.rel target = $region5
    $region4: #{embedding_lookup.1} parent=1 // pred_region
      %20 = sst [smem:[#allocation10]] [#allocation9]
      %21 = sst [smem:[#allocation11]] [#allocation8]
    $region5: #{embedding_lookup.1} parent=1 // pred_fallthru
      _
    %23 = shalt.err (0)
    %s25 = sshll.u32 [#allocation2], 4
    %s26 = int_to_ptr.vmem [resolvable:$true] %s25
    %28 = dma.hbm_to_vmem [thread:$0]  %s17, 16, %s26, [#allocation3]
    %s29 = sadd.s32 %s14, 1
    %s30 = sld [smem:[#allocation5 + %s29]]
    %s31 = smul.addr %s30, 16
    %s32 = scalar_lea.hbm %s1, %s31
    %s33 = scalar_lea.vmem [#allocation2], 1
    %s34 = scalar_lea.sflag [#allocation3], 1
    // Predicated region
    $region6: #{embedding_lookup.1} parent=1 // pred_check
      _
    $region7: #{embedding_lookup.1} parent=1 // pred_check_branch
      %36 = sbr.rel target = $region9
    $region8: #{embedding_lookup.1} parent=1 // pred_region
      %37 = sst [smem:[#allocation10]] [#allocation13]
      %38 = sst [smem:[#allocation11]] [#allocation12]
    $region9: #{embedding_lookup.1} parent=1 // pred_fallthru
      _
    %40 = shalt.err (0)
    %s42 = sshll.u32 %s33, 4
    %s43 = int_to_ptr.vmem [resolvable:$true] %s42
    %45 = dma.hbm_to_vmem [thread:$0]  %s32, 16, %s43, %s34
    %s46 = sadd.s32 %s14, 2
    %s47 = sld [smem:[#allocation5 + %s46]]
    %s48 = smul.addr %s47, 16
    %s49 = scalar_lea.hbm %s1, %s48
    %s50 = scalar_lea.vmem [#allocation2], 2
    %s51 = scalar_lea.sflag [#allocation3], 2
    // Predicated region
    $region10: #{embedding_lookup.1} parent=1 // pred_check
      _
    $region11: #{embedding_lookup.1} parent=1 // pred_check_branch
      %53 = sbr.rel target = $region13
    $region12: #{embedding_lookup.1} parent=1 // pred_region
      %54 = sst [smem:[#allocation10]] [#allocation15]
      %55 = sst [smem:[#allocation11]] [#allocation14]
    $region13: #{embedding_lookup.1} parent=1 // pred_fallthru
      _
    %57 = shalt.err (0)
    %s59 = sshll.u32 %s50, 4
    %s60 = int_to_ptr.vmem [resolvable:$true] %s59
    %62 = dma.hbm_to_vmem [thread:$0]  %s49, 16, %s60, %s51
    %s63 = sadd.s32 %s14, 3
    %s64 = sld [smem:[#allocation5 + %s63]]
    %s65 = smul.addr %s64, 16
    %s66 = scalar_lea.hbm %s1, %s65
    %s67 = scalar_lea.vmem [#allocation2], 3
    %s68 = scalar_lea.sflag [#allocation3], 3
    // Predicated region
    $region14: #{embedding_lookup.1} parent=1 // pred_check
      _
    $region15: #{embedding_lookup.1} parent=1 // pred_check_branch
      %70 = sbr.rel target = $region17
    $region16: #{embedding_lookup.1} parent=1 // pred_region
      %71 = sst [smem:[#allocation10]] [#allocation17]
      %72 = sst [smem:[#allocation11]] [#allocation16]
    $region17: #{embedding_lookup.1} parent=1 // pred_fallthru
      _
    %74 = shalt.err (0)
    %s76 = sshll.u32 %s67, 4
    %s77 = int_to_ptr.vmem [resolvable:$true] %s76
    %79 = dma.hbm_to_vmem [thread:$0]  %s66, 16, %s77, %s68
    %s80 = sadd.s32 %s14, 4
    %s81 = sld [smem:[#allocation5 + %s80]]
    %s82 = smul.addr %s81, 16
    %s83 = scalar_lea.hbm %s1, %s82
    %s84 = scalar_lea.vmem [#allocation2], 4
    %s85 = scalar_lea.sflag [#allocation3], 4
    // Predicated region
    $region18: #{embedding_lookup.1} parent=1 // pred_check
      _
    $region19: #{embedding_lookup.1} parent=1 // pred_check_branch
      %87 = sbr.rel target = $region21
    $region20: #{embedding_lookup.1} parent=1 // pred_region
      %88 = sst [smem:[#allocation10]] [#allocation19]
      %89 = sst [smem:[#allocation11]] [#allocation18]
    $region21: #{embedding_lookup.1} parent=1 // pred_fallthru
      _
    %91 = shalt.err (0)
    %s93 = sshll.u32 %s84, 4
    %s94 = int_to_ptr.vmem [resolvable:$true] %s93
    %96 = dma.hbm_to_vmem [thread:$0]  %s83, 16, %s94, %s85
    %s97 = sadd.s32 %s14, 5
    %s98 = sld [smem:[#allocation5 + %s97]]
    %s99 = smul.addr %s98, 16
    %s100 = scalar_lea.hbm %s1, %s99
    %s101 = scalar_lea.vmem [#allocation2], 5
    %s102 = scalar_lea.sflag [#allocation3], 5
    // Predicated region
    $region22: #{embedding_lookup.1} parent=1 // pred_check
      _
    $region23: #{embedding_lookup.1} parent=1 // pred_check_branch
      %104 = sbr.rel target = $region25
    $region24: #{embedding_lookup.1} parent=1 // pred_region
      %105 = sst [smem:[#allocation10]] [#allocation21]
      %106 = sst [smem:[#allocation11]] [#allocation20]
    $region25: #{embedding_lookup.1} parent=1 // pred_fallthru
      _
    %108 = shalt.err (0)
    %s110 = sshll.u32 %s101, 4
    %s111 = int_to_ptr.vmem [resolvable:$true] %s110
    %113 = dma.hbm_to_vmem [thread:$0]  %s100, 16, %s111, %s102
    %s114 = sadd.s32 %s14, 6
    %s115 = sld [smem:[#allocation5 + %s114]]
    %s116 = smul.addr %s115, 16
    %s117 = scalar_lea.hbm %s1, %s116
    %s118 = scalar_lea.vmem [#allocation2], 6
    %s119 = scalar_lea.sflag [#allocation3], 6
    // Predicated region
    $region26: #{embedding_lookup.1} parent=1 // pred_check
      _
    $region27: #{embedding_lookup.1} parent=1 // pred_check_branch
      %121 = sbr.rel target = $region29
    $region28: #{embedding_lookup.1} parent=1 // pred_region
      %122 = sst [smem:[#allocation10]] [#allocation23]
      %123 = sst [smem:[#allocation11]] [#allocation22]
    $region29: #{embedding_lookup.1} parent=1 // pred_fallthru
      _
    %125 = shalt.err (0)
    %s127 = sshll.u32 %s118, 4
    %s128 = int_to_ptr.vmem [resolvable:$true] %s127
    %130 = dma.hbm_to_vmem [thread:$0]  %s117, 16, %s128, %s119
    %s131 = sadd.s32 %s14, 7
    %s132 = sld [smem:[#allocation5 + %s131]]
    %s133 = smul.addr %s132, 16
    %s134 = scalar_lea.hbm %s1, %s133
    %s135 = scalar_lea.vmem [#allocation2], 7
    %s136 = scalar_lea.sflag [#allocation3], 7
    // Predicated region
    $region30: #{embedding_lookup.1} parent=1 // pred_check
      _
    $region31: #{embedding_lookup.1} parent=1 // pred_check_branch
      %138 = sbr.rel target = $region33
    $region32: #{embedding_lookup.1} parent=1 // pred_region
      %139 = sst [smem:[#allocation10]] [#allocation25]
      %140 = sst [smem:[#allocation11]] [#allocation24]
    $region33: #{embedding_lookup.1} parent=1 // pred_fallthru
      _
    %142 = shalt.err (0)
    %s144 = sshll.u32 %s135, 4
    %s145 = int_to_ptr.vmem [resolvable:$true] %s144
    %147 = dma.hbm_to_vmem [thread:$0]  %s134, 16, %s145, %s136
    %s148 = smul.u32 1, 1
    %s149 = sshll.u32 %s148, 4
    %150 = dma.done [#allocation3], %s149
    %s151 = sshll.u32 %s148, 4
    %152 = dma.done %s34, %s151
    %s153 = sshll.u32 %s148, 4
    %154 = dma.done %s51, %s153
    %s155 = sshll.u32 %s148, 4
    %156 = dma.done %s68, %s155
    %s157 = sshll.u32 %s148, 4
    %158 = dma.done %s85, %s157
    %s159 = sshll.u32 %s148, 4
    %160 = dma.done %s102, %s159
    %s161 = sshll.u32 %s148, 4
    %162 = dma.done %s119, %s161
    %s163 = sshll.u32 %s148, 4
    %164 = dma.done %s136, %s163
    %v165 = vld [vmem:[#allocation2] sm:$0xff]
    %166 = vst [vmem:[#allocation6] sm:$0xff] %v165
    // Predicated region
    $region34: #{embedding_lookup.1} parent=1 // pred_check
      _
    $region35: #{embedding_lookup.1} parent=1 // pred_check_branch
      %168 = sbr.rel (0) target = $region37
    $region36: #{embedding_lookup.1} parent=1 // pred_region
      %s170 = ssub.s32 128, 128
      %171 = vsyncadd [#allocation7], %s170
      %s173 = sshll.u32 [#allocation6], 4
      %s174 = int_to_ptr.vmem [resolvable:$true] %s173
      %176 = dma.vmem_to_hbm [thread:$0]  %s174, 128, %s2, [#allocation7]
    $region37: #{embedding_lookup.1} parent=1 // pred_fallthru
      _
    // Predicated region
    $region38: #{embedding_lookup.1} parent=1 // pred_check
      _
    $region39: #{embedding_lookup.1} parent=1 // pred_check_branch
      %178 = sbr.rel (0) target = $region41
    $region40: #{embedding_lookup.1} parent=1 // pred_region
      %179 = dma.done [#allocation7], 128
    $region41: #{embedding_lookup.1} parent=1 // pred_fallthru
      _
    %180 = vsyncpa [#allocation7], 1
  %181 = vsyncmov [#allocation3]
  %s182 = vpop.sfrf %181
  %p183 = scmp.eq.s32.totalorder %s182, 0
  %p184 = pneg %p183
  %186 = shalt.err (%p184)
  %s187 = scalar_lea.sflag [#allocation3], 1
  %188 = vsyncmov %s187
  %s189 = vpop.sfrf %188
  %p190 = scmp.eq.s32.totalorder %s189, 0
  %p191 = pneg %p190
  %193 = shalt.err (%p191)
  %s194 = scalar_lea.sflag [#allocation3], 2
  %195 = vsyncmov %s194
  %s196 = vpop.sfrf %195
  %p197 = scmp.eq.s32.totalorder %s196, 0
  %p198 = pneg %p197
  %200 = shalt.err (%p198)
  %s201 = scalar_lea.sflag [#allocation3], 3
  %202 = vsyncmov %s201
  %s203 = vpop.sfrf %202
  %p204 = scmp.eq.s32.totalorder %s203, 0
  %p205 = pneg %p204
  %207 = shalt.err (%p205)
  %s208 = scalar_lea.sflag [#allocation3], 4
  %209 = vsyncmov %s208
  %s210 = vpop.sfrf %209
  %p211 = scmp.eq.s32.totalorder %s210, 0
  %p212 = pneg %p211
  %214 = shalt.err (%p212)
  %s215 = scalar_lea.sflag [#allocation3], 5
  %216 = vsyncmov %s215
  %s217 = vpop.sfrf %216
  %p218 = scmp.eq.s32.totalorder %s217, 0
  %p219 = pneg %p218
  %221 = shalt.err (%p219)
  %s222 = scalar_lea.sflag [#allocation3], 6
  %223 = vsyncmov %s222
  %s224 = vpop.sfrf %223
  %p225 = scmp.eq.s32.totalorder %s224, 0
  %p226 = pneg %p225
  %228 = shalt.err (%p226)
  %s229 = scalar_lea.sflag [#allocation3], 7
  %230 = vsyncmov %s229
  %s231 = vpop.sfrf %230
  %p232 = scmp.eq.s32.totalorder %s231, 0
  %p233 = pneg %p232
  %235 = shalt.err (%p233)

</llo_original>
